<compile_context>
chip_gen: v7x
topology: tpu7x:2x2x1
jax: 0.10.0
libtpu: 0.0.40
codegen_flags: <defaults>
</compile_context>

<pallas_src>
import jax
import jax.numpy as jnp
from jax import lax
from jax.experimental import pallas as pl
from jax.experimental.pallas import tpu as pltpu


_ERF_ALPHA = (-2.72614225801306e-10, 2.77068142495902e-08,
              -2.10102402082508e-06, -5.69250639462346e-05,
              -7.34990630326855e-04, -2.95459980854025e-03,
              -1.60960333262415e-02)
_ERF_BETA = (-1.45660718464996e-05, -2.13374055278905e-04,
             -1.68282697438203e-03, -7.37332916720468e-03,
             -1.42647390514189e-02)


def _erf_f32(x):
    """f32 erf via the XLA/Eigen rational approximation (VPU ops only)."""
    x = jnp.clip(x, -4.0, 4.0)
    x2 = x * x
    p = jnp.float32(_ERF_ALPHA[0])
    for c in _ERF_ALPHA[1:]:
        p = p * x2 + jnp.float32(c)
    q = jnp.float32(_ERF_BETA[0])
    for c in _ERF_BETA[1:]:
        q = q * x2 + jnp.float32(c)
    return (x * p) / q


def _fused_convT_gelu_kernel(w_ref, b_ref, x_ref, o_ref):
    """Crop + 1x1 transposed-conv channel mix + (0.5*y)*erf(y/sqrt(2)).

    w_ref: SMEM (Cin*Cout,) f32  -- scalar reads, index w[c*Cout + o]
    b_ref: SMEM (Cout,)     f32  -- scalar reads
    x_ref: VMEM (Cin*H, W)        f32   (channels collapsed into sublanes)
    o_ref: VMEM (Cout, H-2, W-2)  f32
    """
    Cout, Ho, Wo = o_ref.shape
    CinH, W = x_ref.shape
    H = Ho + 2
    Cin = CinH // H

    # Hoisted, cropped per-channel loads (static slices; padding=1 on a 1x1
    # transposed conv == crop 1 pixel from every spatial edge).
    xs = [x_ref[c * H + 1:c * H + 1 + Ho, 1:1 + Wo] for c in range(Cin)]

    def body(o, carry):
        acc = xs[0] * w_ref[o]                     # c = 0
        for c in range(1, Cin):                    # Cin = 3, tiny static unroll
            acc = acc + xs[c] * w_ref[c * Cout + o]
        y = acc + b_ref[o]
        o_ref[o] = (0.5 * y) * _erf_f32(y * 0.7071067811865476)
        return carry

    # Rolled loop bounds the per-channel live set (acc + erf temporaries).
    lax.fori_loop(0, Cout, body, 0)


def model_forward(x_nchw, weight, bias):
    """Reproduces Model.forward.

    x_nchw: (N, 3, H, W) f32
    weight: (Cin=3, Cout=8, 1, 1)  -- PyTorch ConvTranspose2d weight layout
    bias:   (Cout=8,)
    returns (N, 8, H-2, W-2) f32
    """
    N, Cin, H, W = x_nchw.shape
    Cout = weight.shape[1]
    Ho, Wo = H - 2, W - 2

    w_flat = weight.reshape(Cin * Cout).astype(x_nchw.dtype)  # (c, o) row-major
    x2d = x_nchw.reshape(N, Cin * H, W)                       # free on contiguous NCHW

    smem = pl.BlockSpec(memory_space=pltpu.MemorySpace.SMEM)
    vmem = pl.BlockSpec(memory_space=pltpu.MemorySpace.VMEM)

    if N == 1:
        # Fixed-overhead regime: single grid-less call, everything VMEM-resident.
        out = pl.pallas_call(
            _fused_convT_gelu_kernel,
            out_shape=jax.ShapeDtypeStruct((Cout, Ho, Wo), x_nchw.dtype),
            in_specs=[smem, smem, vmem],
            out_specs=vmem,
        )(w_flat, bias, x2d[0])
        return out[None]

    # Batched: one grid step per image; "parallel" shards across both v7x TCs.
    return pl.pallas_call(
        _fused_convT_gelu_kernel,
        out_shape=jax.ShapeDtypeStruct((N, Cout, Ho, Wo), x_nchw.dtype),
        grid=(N,),
        in_specs=[
            smem,
            smem,
            pl.BlockSpec((None, Cin * H, W), lambda n: (n, 0, 0)),
        ],
        out_specs=pl.BlockSpec((None, Cout, Ho, Wo), lambda n: (n, 0, 0, 0)),
        compiler_params=pltpu.CompilerParams(
            dimension_semantics=("parallel",)),
    )(w_flat, bias, x2d)


def _reference(x, weight, bias):
    """Pure-JAX reference of the module's forward (no matmul, f32 exact order)."""
    Cin, Cout = weight.shape[0], weight.shape[1]
    w2 = weight.reshape(Cin, Cout)
    y = sum(x[:, c][:, None, :, :] * w2[c][None, :, None, None]
            for c in range(Cin))
    y = y + bias[None, :, None, None]
    y = y[:, :, 1:-1, 1:-1]
    return (0.5 * y) * jax.lax.erf(y * 0.7071067811865476)


if __name__ == "__main__":
    key = jax.random.PRNGKey(0)
    kx, kw, kb, kx2 = jax.random.split(key, 4)

    # Input matching the module's usage: (1, 3, 25, 64)
    x1 = jax.random.normal(kx, (1, 3, 25, 64), dtype=jnp.float32)

    # ConvTranspose2d(3, 8, 1) parameters: weight (in=3, out=8, 1, 1), bias (8,)
    fan = 3 * 1 * 1
    bound = 1.0 / (fan ** 0.5)
    weight = jax.random.uniform(kw, (3, 8, 1, 1), jnp.float32, -bound, bound)
    bias = jax.random.uniform(kb, (8,), jnp.float32, -bound, bound)

    fwd = jax.jit(model_forward)

    out = jax.block_until_ready(fwd(x1, weight, bias))
    assert out.shape == (1, 8, 23, 62), out.shape
    assert out.dtype == jnp.float32
    ref = _reference(x1, weight, bias)
    assert jnp.allclose(out, ref, rtol=1e-4, atol=1e-4), float(
        jnp.max(jnp.abs(out - ref)))

    # Batched path (amortizes fixed overhead; parallel grid over N for v7x TCs).
    xb = jax.random.normal(kx2, (2, 3, 25, 64), dtype=jnp.float32)
    outb = jax.block_until_ready(fwd(xb, weight, bias))
    assert outb.shape == (2, 8, 23, 62), outb.shape
    refb = _reference(xb, weight, bias)
    assert jnp.allclose(outb, refb, rtol=1e-4, atol=1e-4)

    print("KERNEL_OK")
</pallas_src>

<mosaic_0001>
module attributes {stable_mosaic.version = 11 : i64} {
  func.func @_fused_convT_gelu_kernel(%arg0: memref<24xf32, #tpu.memory_space<smem>>, %arg1: memref<8xf32, #tpu.memory_space<smem>>, %arg2: memref<75x64xf32, #tpu.memory_space<vmem>>, %arg3: memref<8x23x62xf32, #tpu.memory_space<vmem>>) attributes {dimension_semantics = [], scalar_prefetch = 0 : i64, scratch_operands = 0 : i64, tpu.core_type = #tpu.core_type<tc>} {
    %c1 = arith.constant 1 : index
    %c1_0 = arith.constant 1 : index
    %0 = vector.load %arg2[%c1, %c1_0] : memref<75x64xf32, #tpu.memory_space<vmem>>, vector<23x62xf32>
    %c26 = arith.constant 26 : index
    %c1_1 = arith.constant 1 : index
    %1 = vector.load %arg2[%c26, %c1_1] : memref<75x64xf32, #tpu.memory_space<vmem>>, vector<23x62xf32>
    %c51 = arith.constant 51 : index
    %c1_2 = arith.constant 1 : index
    %2 = vector.load %arg2[%c51, %c1_2] : memref<75x64xf32, #tpu.memory_space<vmem>>, vector<23x62xf32>
    %c0_i32 = arith.constant 0 : i32
    %c8_i32 = arith.constant 8 : i32
    %3 = arith.addi %c0_i32, %c8_i32 : i32
    %c1_i32 = arith.constant 1 : i32
    scf.for %arg4 = %c0_i32 to %3 step %c1_i32  : i32 {
      %4 = arith.index_cast %arg4 : i32 to index
      %5 = memref.load %arg0[%4] : memref<24xf32, #tpu.memory_space<smem>>
      %6 = vector.broadcast %5 : f32 to vector<23x62xf32>
      %7 = arith.mulf %0, %6 : vector<23x62xf32>
      %c8_i32_4 = arith.constant 8 : i32
      %8 = arith.addi %c8_i32_4, %arg4 : i32
      %9 = arith.index_cast %8 : i32 to index
      %10 = memref.load %arg0[%9] : memref<24xf32, #tpu.memory_space<smem>>
      %11 = vector.broadcast %10 : f32 to vector<23x62xf32>
      %12 = arith.mulf %1, %11 : vector<23x62xf32>
      %13 = arith.addf %7, %12 : vector<23x62xf32>
      %c16_i32 = arith.constant 16 : i32
      %14 = arith.addi %c16_i32, %arg4 : i32
      %15 = arith.index_cast %14 : i32 to index
      %16 = memref.load %arg0[%15] : memref<24xf32, #tpu.memory_space<smem>>
      %17 = vector.broadcast %16 : f32 to vector<23x62xf32>
      %18 = arith.mulf %2, %17 : vector<23x62xf32>
      %19 = arith.addf %13, %18 : vector<23x62xf32>
      %20 = arith.index_cast %arg4 : i32 to index
      %21 = memref.load %arg1[%20] : memref<8xf32, #tpu.memory_space<smem>>
      %22 = vector.broadcast %21 : f32 to vector<23x62xf32>
      %23 = arith.addf %19, %22 : vector<23x62xf32>
      %cst = arith.constant 5.000000e-01 : f32
      %24 = vector.broadcast %cst : f32 to vector<23x62xf32>
      %25 = arith.mulf %24, %23 : vector<23x62xf32>
      %cst_5 = arith.constant 0.707106769 : f32
      %26 = vector.broadcast %cst_5 : f32 to vector<23x62xf32>
      %27 = arith.mulf %23, %26 : vector<23x62xf32>
      %cst_6 = arith.constant -4.000000e+00 : f32
      %cst_7 = arith.constant 4.000000e+00 : f32
      %28 = vector.broadcast %cst_6 : f32 to vector<23x62xf32>
      %29 = arith.maximumf %28, %27 : vector<23x62xf32>
      %30 = vector.broadcast %cst_7 : f32 to vector<23x62xf32>
      %31 = arith.minimumf %30, %29 : vector<23x62xf32>
      %32 = arith.mulf %31, %31 : vector<23x62xf32>
      %cst_8 = arith.constant -2.72614237E-10 : f32
      %33 = vector.broadcast %cst_8 : f32 to vector<23x62xf32>
      %34 = arith.mulf %33, %32 : vector<23x62xf32>
      %cst_9 = arith.constant 2.77068146E-8 : f32
      %35 = vector.broadcast %cst_9 : f32 to vector<23x62xf32>
      %36 = arith.addf %34, %35 : vector<23x62xf32>
      %37 = arith.mulf %36, %32 : vector<23x62xf32>
      %cst_10 = arith.constant -2.10102394E-6 : f32
      %38 = vector.broadcast %cst_10 : f32 to vector<23x62xf32>
      %39 = arith.addf %37, %38 : vector<23x62xf32>
      %40 = arith.mulf %39, %32 : vector<23x62xf32>
      %cst_11 = arith.constant -5.69250624E-5 : f32
      %41 = vector.broadcast %cst_11 : f32 to vector<23x62xf32>
      %42 = arith.addf %40, %41 : vector<23x62xf32>
      %43 = arith.mulf %42, %32 : vector<23x62xf32>
      %cst_12 = arith.constant -7.34990637E-4 : f32
      %44 = vector.broadcast %cst_12 : f32 to vector<23x62xf32>
      %45 = arith.addf %43, %44 : vector<23x62xf32>
      %46 = arith.mulf %45, %32 : vector<23x62xf32>
      %cst_13 = arith.constant -2.954600e-03 : f32
      %47 = vector.broadcast %cst_13 : f32 to vector<23x62xf32>
      %48 = arith.addf %46, %47 : vector<23x62xf32>
      %49 = arith.mulf %48, %32 : vector<23x62xf32>
      %cst_14 = arith.constant -0.0160960332 : f32
      %50 = vector.broadcast %cst_14 : f32 to vector<23x62xf32>
      %51 = arith.addf %49, %50 : vector<23x62xf32>
      %cst_15 = arith.constant -1.45660715E-5 : f32
      %52 = vector.broadcast %cst_15 : f32 to vector<23x62xf32>
      %53 = arith.mulf %52, %32 : vector<23x62xf32>
      %cst_16 = arith.constant -2.13374049E-4 : f32
      %54 = vector.broadcast %cst_16 : f32 to vector<23x62xf32>
      %55 = arith.addf %53, %54 : vector<23x62xf32>
      %56 = arith.mulf %55, %32 : vector<23x62xf32>
      %cst_17 = arith.constant -0.00168282702 : f32
      %57 = vector.broadcast %cst_17 : f32 to vector<23x62xf32>
      %58 = arith.addf %56, %57 : vector<23x62xf32>
      %59 = arith.mulf %58, %32 : vector<23x62xf32>
      %cst_18 = arith.constant -0.00737332925 : f32
      %60 = vector.broadcast %cst_18 : f32 to vector<23x62xf32>
      %61 = arith.addf %59, %60 : vector<23x62xf32>
      %62 = arith.mulf %61, %32 : vector<23x62xf32>
      %cst_19 = arith.constant -0.0142647391 : f32
      %63 = vector.broadcast %cst_19 : f32 to vector<23x62xf32>
      %64 = arith.addf %62, %63 : vector<23x62xf32>
      %65 = arith.mulf %31, %51 : vector<23x62xf32>
      %66 = arith.divf %65, %64 : vector<23x62xf32>
      %67 = arith.mulf %25, %66 : vector<23x62xf32>
      %68 = arith.index_cast %arg4 : i32 to index
      %c0 = arith.constant 0 : index
      %c0_20 = arith.constant 0 : index
      %69 = vector.load %arg3[%68, %c0, %c0_20] : memref<8x23x62xf32, #tpu.memory_space<vmem>>, vector<1x23x62xf32>
      %70 = vector.shape_cast %69 : vector<1x23x62xf32> to vector<23x62xf32>
      %71 = vector.shape_cast %67 : vector<23x62xf32> to vector<1x23x62xf32>
      tpu.vector_store %arg3[%68, %c0, %c0_20], %71 {strides = array<i32>} : memref<8x23x62xf32, #tpu.memory_space<vmem>>, vector<1x23x62xf32>,
    }
    %c8_i32_3 = arith.constant 8 : i32
    return
  }
}

</mosaic_0001>

<llo_original>
// kernel: model_forward.1
$region0: #{model_forward.1}
  #allocation0 [shape = 'u32[]', space=smem, size = 0x4, offset = 0x4, fixed_abs, tag = 'smem constant byte address 0x4 - core index']
  #allocation1 [shape = 'u32[144,128]{1,0:T(1,128)}', space=vmem, size = 0x12000, scoped, tag = 'internal scratch']
  %s0 = inlined_call_operand.vmem [shape: f32[24], index: 0, kind: input, shape index: {}]
  %s1 = inlined_call_operand.vmem [shape: f32[8], index: 1, kind: input, shape index: {}]
  %s2 = inlined_call_operand.vmem [shape: f32[75,64], index: 2, kind: input, shape index: {}]
  %s3 = inlined_call_operand.vmem [shape: f32[8,23,62], index: 3, kind: output, shape index: {}]
  %s4 = sld [smem:[#allocation0]]
  $region37: #{model_forward.1} parent=0
    _
  %s6 = ssub.s32 1, %s4
  %s7 = scalar_select 0, %s6, %s4
  $region1: #{model_forward.1} parent=0
    #allocation2 [shape = 'u8[512]{0}', space=smem, size = 0x200, scoped, tag = 'input window, operand 0, single buffered']
    #allocation3 [shape = 's32[1]{0}', space=sflag, size = 0x4, scoped, tag = 'scoped memory for model_forward.1']
    #allocation4 [shape = 'u8[512]{0}', space=smem, size = 0x200, scoped, tag = 'input window, operand 1, single buffered']
    #allocation5 [shape = 's32[1]{0}', space=sflag, size = 0x4, scoped, tag = 'scoped memory for model_forward.1']
    %8 = vsyncpa [#allocation3], 0
    %9 = vsyncpa [#allocation5], 0
    // Predicated region
    $region2: #{model_forward.1} parent=1 // pred_check
      _
    $region3: #{model_forward.1} parent=1 // pred_check_branch
      %11 = sbr.rel (0) target = $region5
    $region4: #{model_forward.1} parent=1 // pred_region
      %s13 = ssub.s32 16, 16
      %14 = vsyncadd [#allocation3], %s13
      %s16 = sshll.u32 %s0, 4
      %s17 = int_to_ptr.vmem [resolvable:$true] %s16
      %19 = dma.vmem_to_smem %s17, 16, [#allocation2], [#allocation3]
    $region5: #{model_forward.1} parent=1 // pred_fallthru
      _
    // Predicated region
    $region6: #{model_forward.1} parent=1 // pred_check
      _
    $region7: #{model_forward.1} parent=1 // pred_check_branch
      %21 = sbr.rel (0) target = $region9
    $region8: #{model_forward.1} parent=1 // pred_region
      %s23 = ssub.s32 16, 16
      %24 = vsyncadd [#allocation5], %s23
      %s26 = sshll.u32 %s1, 4
      %s27 = int_to_ptr.vmem [resolvable:$true] %s26
      %29 = dma.vmem_to_smem %s27, 16, [#allocation4], [#allocation5]
    $region9: #{model_forward.1} parent=1 // pred_fallthru
      _
    // Predicated region
    $region10: #{model_forward.1} parent=1 // pred_check
      _
    $region11: #{model_forward.1} parent=1 // pred_check_branch
      %31 = sbr.rel (0) target = $region13
    $region12: #{model_forward.1} parent=1 // pred_region
      _
    $region13: #{model_forward.1} parent=1 // pred_fallthru
      _
    // Predicated region
    $region14: #{model_forward.1} parent=1 // pred_check
      _
    $region15: #{model_forward.1} parent=1 // pred_check_branch
      %33 = sbr.rel (0) target = $region17
    $region16: #{model_forward.1} parent=1 // pred_region
      %34 = dma.done [#allocation3], 16
    $region17: #{model_forward.1} parent=1 // pred_fallthru
      _
    // Predicated region
    $region18: #{model_forward.1} parent=1 // pred_check
      _
    $region19: #{model_forward.1} parent=1 // pred_check_branch
      %36 = sbr.rel (0) target = $region21
    $region20: #{model_forward.1} parent=1 // pred_region
      %37 = dma.done [#allocation5], 16
    $region21: #{model_forward.1} parent=1 // pred_fallthru
      _
    %38 = sfence
    %v39 = vld [vmem:[%s2 + $0x1] sm:$0xff]
    %v40 = vld [vmem:[%s2 + $0x9] sm:$0xff]
    %v41 = vld [vmem:[%s2 + $0x11] sm:$0x7f]
    %v42 = vld [vmem:[%s2 + $0x1a] sm:$0xff]
    %v43 = vld [vmem:[%s2 + $0x22] sm:$0xff]
    %v44 = vld [vmem:[%s2 + $0x2a] sm:$0x7f]
    %v45 = vld [vmem:[%s2 + $0x33] sm:$0xff]
    %v46 = vld [vmem:[%s2 + $0x3b] sm:$0xff]
    %v47 = vld [vmem:[%s2 + $0x43] sm:$0x7f]
    loop: start=0, step=1, limit=8
    $region22: #{model_forward.1} parent=1 // loop_pre_header
      _
    $region23: #{model_forward.1} parent=1 // loop_header
      %s49 = sphi 0, %s53
      %p50 = scmp.ge.s32.totalorder %s49, 8
    $region24: #{model_forward.1} parent=1 // loop_header_branch
      %52 = sbr.rel (%p50) target = $region28
    $region25: #{model_forward.1} parent=1 // loop_body
      %s54 = sld [smem:[#allocation2 + %s49]]
      %v55 = vstv %s54
      %v56 = vmul.f32 %v39, %v55
      %v57 = vmul.f32 %v40, %v55
      %v58 = vmul.f32 %v41, %v55
      %s59 = sadd.s32 %s49, 8
      %s60 = sld [smem:[#allocation2 + %s59]]
      %v61 = vstv %s60
      %v62 = vmul.f32 %v42, %v61
      %v63 = vmul.f32 %v43, %v61
      %v64 = vmul.f32 %v44, %v61
      %v65 = vadd.f32 %v56, %v62
      %v66 = vadd.f32 %v57, %v63
      %v67 = vadd.f32 %v58, %v64
      %s68 = sadd.s32 %s49, 16
      %s69 = sld [smem:[#allocation2 + %s68]]
      %v70 = vstv %s69
      %v71 = vmul.f32 %v45, %v70
      %v72 = vmul.f32 %v46, %v70
      %v73 = vmul.f32 %v47, %v70
      %v74 = vadd.f32 %v65, %v71
      %v75 = vadd.f32 %v66, %v72
      %v76 = vadd.f32 %v67, %v73
      %s77 = sld [smem:[#allocation4 + %s49]]
      %v78 = vstv %s77
      %v79 = vadd.f32 %v74, %v78
      %v80 = vadd.f32 %v75, %v78
      %v81 = vadd.f32 %v76, %v78
      %v82 = vmul.f32 %v79, 0.5
      %v83 = vmul.f32 %v80, 0.5
      %v84 = vmul.f32 %v81, 0.5
      %v85 = vmul.f32 %v79, 0.70710677
      %v86 = vmul.f32 %v80, 0.70710677
      %v87 = vmul.f32 %v81, 0.70710677
      %v88 = vmax.f32 %v85, -4.0
      %v89 = vmax.f32 %v86, -4.0
      %v90 = vmax.f32 %v87, -4.0
      %v91 = vmin.f32 %v88, 4.0
      %v92 = vmin.f32 %v89, 4.0
      %v93 = vmin.f32 %v90, 4.0
      %v94 = vmul.f32 %v91, %v91
      %v95 = vmul.f32 %v92, %v92
      %v96 = vmul.f32 %v93, %v93
      %v97 = vmul.f32 %v94, -2.7261424e-10
      %v98 = vmul.f32 %v95, -2.7261424e-10
      %v99 = vmul.f32 %v96, -2.7261424e-10
      %v100 = vadd.f32 %v97, 2.7706815e-08
      %v101 = vadd.f32 %v98, 2.7706815e-08
      %v102 = vadd.f32 %v99, 2.7706815e-08
      %v103 = vmul.f32 %v100, %v94
      %v104 = vmul.f32 %v101, %v95
      %v105 = vmul.f32 %v102, %v96
      %v106 = vadd.f32 %v103, -2.101024e-06
      %v107 = vadd.f32 %v104, -2.101024e-06
      %v108 = vadd.f32 %v105, -2.101024e-06
      %v109 = vmul.f32 %v106, %v94
      %v110 = vmul.f32 %v107, %v95
      %v111 = vmul.f32 %v108, %v96
      %v112 = vadd.f32 %v109, -5.6925062e-05
      %v113 = vadd.f32 %v110, -5.6925062e-05
      %v114 = vadd.f32 %v111, -5.6925062e-05
      %v115 = vmul.f32 %v112, %v94
      %v116 = vmul.f32 %v113, %v95
      %v117 = vmul.f32 %v114, %v96
      %v118 = vadd.f32 %v115, -0.00073499064
      %v119 = vadd.f32 %v116, -0.00073499064
      %v120 = vadd.f32 %v117, -0.00073499064
      %v121 = vmul.f32 %v118, %v94
      %v122 = vmul.f32 %v119, %v95
      %v123 = vmul.f32 %v120, %v96
      %v124 = vadd.f32 %v121, -0.0029546
      %v125 = vadd.f32 %v122, -0.0029546
      %v126 = vadd.f32 %v123, -0.0029546
      %v127 = vmul.f32 %v124, %v94
      %v128 = vmul.f32 %v125, %v95
      %v129 = vmul.f32 %v126, %v96
      %v130 = vadd.f32 %v127, -0.016096033
      %v131 = vadd.f32 %v128, -0.016096033
      %v132 = vadd.f32 %v129, -0.016096033
      %v133 = vmul.f32 %v94, -1.45660715e-05
      %v134 = vmul.f32 %v95, -1.45660715e-05
      %v135 = vmul.f32 %v96, -1.45660715e-05
      %v136 = vadd.f32 %v133, -0.00021337405
      %v137 = vadd.f32 %v134, -0.00021337405
      %v138 = vadd.f32 %v135, -0.00021337405
      %v139 = vmul.f32 %v136, %v94
      %v140 = vmul.f32 %v137, %v95
      %v141 = vmul.f32 %v138, %v96
      %v142 = vadd.f32 %v139, -0.001682827
      %v143 = vadd.f32 %v140, -0.001682827
      %v144 = vadd.f32 %v141, -0.001682827
      %v145 = vmul.f32 %v142, %v94
      %v146 = vmul.f32 %v143, %v95
      %v147 = vmul.f32 %v144, %v96
      %v148 = vadd.f32 %v145, -0.0073733293
      %v149 = vadd.f32 %v146, -0.0073733293
      %v150 = vadd.f32 %v147, -0.0073733293
      %v151 = vmul.f32 %v148, %v94
      %v152 = vmul.f32 %v149, %v95
      %v153 = vmul.f32 %v150, %v96
      %v154 = vadd.f32 %v151, -0.014264739
      %v155 = vadd.f32 %v152, -0.014264739
      %v156 = vadd.f32 %v153, -0.014264739
      %v157 = vmul.f32 %v91, %v130
      %v158 = vmul.f32 %v92, %v131
      %v159 = vmul.f32 %v93, %v132
      %v160 = vrcp.pop %v154
      %v161 = vmul.f32 %v157, %v160
      %v162 = vrcp.pop %v155
      %v163 = vmul.f32 %v158, %v162
      %v164 = vrcp.pop %v156
      %v165 = vmul.f32 %v159, %v164
      %v166 = vmul.f32 %v82, %v161
      %v167 = vmul.f32 %v83, %v163
      %v168 = vmul.f32 %v84, %v165
      %172 = vrot.lane.b32.xlu0 %v166, 127
      %v173 = vpop.permute.xlu0 %172
      %174 = vrot.lane.b32.xlu0 %v167, 127
      %v175 = vpop.permute.xlu0 %174
      %176 = vrot.lane.b32.xlu0 %v168, 127
      %v177 = vpop.permute.xlu0 %176
      %s181 = smul.u32 %s49, 24
      %s182 = scalar_lea.vmem %s3, %s181
      %vm183 = vcmask 506880
      %184 = vst.msk [vmem:[%s182] sm:$0xff] %vm183, %v173
      %185 = vst.msk [vmem:[%s182 + $0x8] sm:$0xff] %vm183, %v175
      %vm186 = vcmask 505856
      %187 = vst.msk [vmem:[%s182 + $0x10] sm:$0x7f] %vm186, %v177
    $region26: #{model_forward.1} parent=1 // loop_footer
      %s53 = sadd.s32 1, %s49
    $region27: #{model_forward.1} parent=1 // loop_footer_branch
      %48 = sbr.rel target = $region23
    $region28: #{model_forward.1} parent=1 // loop_exit
      _
    // Predicated region
    $region29: #{model_forward.1} parent=1 // pred_check
      _
    $region30: #{model_forward.1} parent=1 // pred_check_branch
      %189 = sbr.rel (0) target = $region32
    $region31: #{model_forward.1} parent=1 // pred_region
      _
    $region32: #{model_forward.1} parent=1 // pred_fallthru
      _
    // Predicated region
    $region33: #{model_forward.1} parent=1 // pred_check
      _
    $region34: #{model_forward.1} parent=1 // pred_check_branch
      %191 = sbr.rel (0) target = $region36
    $region35: #{model_forward.1} parent=1 // pred_region
      _
    $region36: #{model_forward.1} parent=1 // pred_fallthru
      _
    %192 = vsyncpa [#allocation3], 1
    %193 = vsyncpa [#allocation5], 1

</llo_original>
